<compile_context>
chip_gen: v5e
topology: v5e:2x2
jax: 0.10.0
libtpu: 0.0.40
codegen_flags: <defaults>
</compile_context>

<pallas_src>
import jax
import jax.numpy as jnp
from jax.experimental import pallas as pl
from jax.experimental.pallas import tpu as pltpu


def _critic_kernel(s_ref, a_ref, w1s_ref, w1a_ref, b1_ref, w2_ref, b2_ref,
                   w3_ref, b3_ref, out_ref):
    # Layer 1: fused concat -> two MXU dots sharing one f32 accumulate.
    h1 = (jnp.dot(s_ref[...], w1s_ref[...], preferred_element_type=jnp.float32)
          + jnp.dot(a_ref[...], w1a_ref[...], preferred_element_type=jnp.float32)
          + b1_ref[...])                                   # [TB, H] f32
    h1 = jnp.maximum(h1, 0.0)

    # Layer 2: bf16 MXU operands, f32 accumulate; bias/ReLU in f32.
    h2 = jnp.dot(h1.astype(w2_ref.dtype), w2_ref[...],
                 preferred_element_type=jnp.float32) + b2_ref[...]
    h2 = jnp.maximum(h2, 0.0)                              # [TB, H] f32

    # Layer 3 on the VPU/XLU: broadcast w3 row, lane reduction -> lane-dense output
    # block (1, TB) (no masked [TB, 1] stores).
    q = jnp.sum(h2 * w3_ref[...], axis=-1)                 # [TB] f32
    out_ref[...] = (q[None, :] + b3_ref[...]).astype(out_ref.dtype)   # [1, TB]


def critic_forward(state, action, params, *, block_rows=512):
    """state: [B, state_dim], action: [B, action_dim] -> Q: [B, 1] (f32)."""
    w1s, w1a, b1, w2, b2, w3, b3 = params
    B, Ds = state.shape
    _, Da = action.shape

    # Row tile: multiple of 128 so the lane-dense output block is stored unmasked.
    TB = max(128, min(block_rows, ((B + 127) // 128) * 128))
    B_pad = ((B + TB - 1) // TB) * TB
    if B_pad != B:
        pad = B_pad - B
        state = jnp.pad(state, ((0, pad), (0, 0)))
        action = jnp.pad(action, ((0, pad), (0, 0)))

    # bf16 streamed inputs / MXU operands (halves HBM bytes); biases & w3 stay f32.
    sb = state.astype(jnp.bfloat16)
    ab = action.astype(jnp.bfloat16)
    w1s_b = w1s.astype(jnp.bfloat16)
    w1a_b = w1a.astype(jnp.bfloat16)
    w2_b = w2.astype(jnp.bfloat16)

    grid = (B_pad // TB,)

    def row_spec(d):
        return pl.BlockSpec((TB, d), lambda i: (i, 0))

    def const_spec(shape):
        return pl.BlockSpec(shape, lambda i: (0, 0))

    out = pl.pallas_call(
        _critic_kernel,
        out_shape=jax.ShapeDtypeStruct((1, B_pad), jnp.float32),
        grid=grid,
        in_specs=[
            row_spec(Ds), row_spec(Da),
            const_spec(w1s.shape), const_spec(w1a.shape), const_spec(b1.shape),
            const_spec(w2.shape), const_spec(b2.shape),
            const_spec(w3.shape), const_spec(b3.shape),
        ],
        out_specs=pl.BlockSpec((1, TB), lambda i: (0, i)),
        compiler_params=pltpu.CompilerParams(
            dimension_semantics=("parallel",)),
    )(sb, ab, w1s_b, w1a_b, b1, w2_b, b2, w3, b3)

    return out[0, :B].reshape(B, 1)


def init_critic_params(key, state_dim, action_dim, hidden_size=48):
    """PyTorch nn.Linear-style init (U[-1/sqrt(fan_in), 1/sqrt(fan_in)]).
    W1 is stored pre-split into its state / action row blocks ([in, out] layout);
    the final weight is kept as a [1, hidden] row for the VPU path."""
    def linear(k, fan_in, fan_out):
        kw, kb = jax.random.split(k)
        bound = 1.0 / (fan_in ** 0.5)
        w = jax.random.uniform(kw, (fan_in, fan_out), jnp.float32, -bound, bound)
        b = jax.random.uniform(kb, (1, fan_out), jnp.float32, -bound, bound)
        return w, b

    k1, k2, k3 = jax.random.split(key, 3)
    w1, b1 = linear(k1, state_dim + action_dim, hidden_size)
    w2, b2 = linear(k2, hidden_size, hidden_size)
    w3, b3 = linear(k3, hidden_size, 1)
    w1s, w1a = w1[:state_dim], w1[state_dim:]
    return (w1s, w1a, b1, w2, b2, w3.T, b3)   # w3.T: [1, hidden]


def critic_reference_f32(state, action, params):
    """Pure-f32 reference (spec semantics)."""
    w1s, w1a, b1, w2, b2, w3, b3 = params
    x = jnp.concatenate([state, action], axis=1)
    w1 = jnp.concatenate([w1s, w1a], axis=0)
    h1 = jnp.maximum(x @ w1 + b1, 0.0)
    h2 = jnp.maximum(h1 @ w2 + b2, 0.0)
    return h2 @ w3.T + b3


def critic_reference_mixed(state, action, params):
    """Reference mirroring the kernel's mixed precision (bf16 operands, f32 accumulate)."""
    w1s, w1a, b1, w2, b2, w3, b3 = params
    sb, ab = state.astype(jnp.bfloat16), action.astype(jnp.bfloat16)
    h1 = (jnp.dot(sb, w1s.astype(jnp.bfloat16), preferred_element_type=jnp.float32)
          + jnp.dot(ab, w1a.astype(jnp.bfloat16), preferred_element_type=jnp.float32)
          + b1)
    h1 = jnp.maximum(h1, 0.0)
    h2 = jnp.dot(h1.astype(jnp.bfloat16), w2.astype(jnp.bfloat16),
                 preferred_element_type=jnp.float32) + b2
    h2 = jnp.maximum(h2, 0.0)
    return jnp.sum(h2 * w3, axis=-1, keepdims=True) + b3


if __name__ == "__main__":
    key = jax.random.PRNGKey(0)
    state_dim, action_dim, hidden_size = 16, 8, 48
    batch = 8

    k_params, k_state, k_action = jax.random.split(key, 3)
    params = init_critic_params(k_params, state_dim, action_dim, hidden_size)
    state = jax.random.normal(k_state, (batch, state_dim), jnp.float32)
    action = jax.random.normal(k_action, (batch, action_dim), jnp.float32)

    q = critic_forward(state, action, params)
    q = jax.block_until_ready(q)
    assert q.shape == (batch, 1)

    # Tight check vs. a reference that mirrors the kernel's mixed precision.
    q_mixed = critic_reference_mixed(state, action, params)
    assert jnp.allclose(q, q_mixed, atol=2e-3, rtol=2e-3), "mismatch vs mixed-precision reference"

    # Looser sanity check vs. the pure-f32 spec semantics (bf16 input rounding).
    q_f32 = critic_reference_f32(state, action, params)
    assert jnp.allclose(q, q_f32, atol=5e-2, rtol=5e-2), "mismatch vs f32 reference"

    print("KERNEL_OK")
</pallas_src>

<mosaic_0001>
module attributes {stable_mosaic.version = 11 : i64} {
  func.func @_critic_kernel(%arg0: i32, %arg1: memref<128x16xbf16, #tpu.memory_space<vmem>>, %arg2: memref<128x8xbf16, #tpu.memory_space<vmem>>, %arg3: memref<16x48xbf16, #tpu.memory_space<vmem>>, %arg4: memref<8x48xbf16, #tpu.memory_space<vmem>>, %arg5: memref<1x48xf32, #tpu.memory_space<vmem>>, %arg6: memref<48x48xbf16, #tpu.memory_space<vmem>>, %arg7: memref<1x48xf32, #tpu.memory_space<vmem>>, %arg8: memref<1x48xf32, #tpu.memory_space<vmem>>, %arg9: memref<1x1xf32, #tpu.memory_space<vmem>>, %arg10: memref<1x128xf32, #tpu.memory_space<vmem>>) attributes {dimension_semantics = [#tpu.dimension_semantics<parallel>], iteration_bounds = array<i64: 1>, scalar_prefetch = 0 : i64, scratch_operands = 0 : i64, tpu.core_type = #tpu.core_type<tc>, window_params = [{transform_indices = @transform_0, window_bounds = array<i64: 128, 16>}, {transform_indices = @transform_1, window_bounds = array<i64: 128, 8>}, {pipeline_mode = #tpu.pipeline_mode<synchronous>, transform_indices = @transform_2, window_bounds = array<i64: 16, 48>}, {pipeline_mode = #tpu.pipeline_mode<synchronous>, transform_indices = @transform_3, window_bounds = array<i64: 8, 48>}, {pipeline_mode = #tpu.pipeline_mode<synchronous>, transform_indices = @transform_4, window_bounds = array<i64: 1, 48>}, {pipeline_mode = #tpu.pipeline_mode<synchronous>, transform_indices = @transform_5, window_bounds = array<i64: 48, 48>}, {pipeline_mode = #tpu.pipeline_mode<synchronous>, transform_indices = @transform_6, window_bounds = array<i64: 1, 48>}, {pipeline_mode = #tpu.pipeline_mode<synchronous>, transform_indices = @transform_7, window_bounds = array<i64: 1, 48>}, {pipeline_mode = #tpu.pipeline_mode<synchronous>, transform_indices = @transform_8, window_bounds = array<i64: 1, 1>}, {transform_indices = @transform_9, window_bounds = array<i64: 1, 128>}]} {
    %c0 = arith.constant 0 : index
    %c0_0 = arith.constant 0 : index
    %0 = vector.load %arg1[%c0, %c0_0] : memref<128x16xbf16, #tpu.memory_space<vmem>>, vector<128x16xbf16>
    %c0_1 = arith.constant 0 : index
    %c0_2 = arith.constant 0 : index
    %1 = vector.load %arg3[%c0_1, %c0_2] : memref<16x48xbf16, #tpu.memory_space<vmem>>, vector<16x48xbf16>
    %cst = arith.constant dense<0.000000e+00> : vector<128x48xf32>
    %2 = tpu.matmul %0, %1, %cst {dimension_numbers = #tpu.dot_dimension_numbers<[1], [0], [0], [1], [0, 0, 1, 1], [], []>} : vector<128x16xbf16>, vector<16x48xbf16>, vector<128x48xf32> -> vector<128x48xf32>
    %c0_3 = arith.constant 0 : index
    %c0_4 = arith.constant 0 : index
    %3 = vector.load %arg2[%c0_3, %c0_4] : memref<128x8xbf16, #tpu.memory_space<vmem>>, vector<128x8xbf16>
    %c0_5 = arith.constant 0 : index
    %c0_6 = arith.constant 0 : index
    %4 = vector.load %arg4[%c0_5, %c0_6] : memref<8x48xbf16, #tpu.memory_space<vmem>>, vector<8x48xbf16>
    %cst_7 = arith.constant dense<0.000000e+00> : vector<128x48xf32>
    %5 = tpu.matmul %3, %4, %cst_7 {dimension_numbers = #tpu.dot_dimension_numbers<[1], [0], [0], [1], [0, 0, 1, 1], [], []>} : vector<128x8xbf16>, vector<8x48xbf16>, vector<128x48xf32> -> vector<128x48xf32>
    %6 = arith.addf %2, %5 : vector<128x48xf32>
    %c0_8 = arith.constant 0 : index
    %c0_9 = arith.constant 0 : index
    %7 = vector.load %arg5[%c0_8, %c0_9] : memref<1x48xf32, #tpu.memory_space<vmem>>, vector<1x48xf32>
    %8 = vector.broadcast %7 : vector<1x48xf32> to vector<128x48xf32>
    %9 = arith.addf %6, %8 : vector<128x48xf32>
    %cst_10 = arith.constant 0.000000e+00 : f32
    %10 = vector.broadcast %cst_10 : f32 to vector<128x48xf32>
    %11 = arith.maximumf %9, %10 : vector<128x48xf32>
    %12 = arith.truncf %11 : vector<128x48xf32> to vector<128x48xbf16>
    %c0_11 = arith.constant 0 : index
    %c0_12 = arith.constant 0 : index
    %13 = vector.load %arg6[%c0_11, %c0_12] : memref<48x48xbf16, #tpu.memory_space<vmem>>, vector<48x48xbf16>
    %cst_13 = arith.constant dense<0.000000e+00> : vector<128x48xf32>
    %14 = tpu.matmul %12, %13, %cst_13 {dimension_numbers = #tpu.dot_dimension_numbers<[1], [0], [0], [1], [0, 0, 1, 1], [], []>} : vector<128x48xbf16>, vector<48x48xbf16>, vector<128x48xf32> -> vector<128x48xf32>
    %c0_14 = arith.constant 0 : index
    %c0_15 = arith.constant 0 : index
    %15 = vector.load %arg7[%c0_14, %c0_15] : memref<1x48xf32, #tpu.memory_space<vmem>>, vector<1x48xf32>
    %16 = vector.broadcast %15 : vector<1x48xf32> to vector<128x48xf32>
    %17 = arith.addf %14, %16 : vector<128x48xf32>
    %cst_16 = arith.constant 0.000000e+00 : f32
    %18 = vector.broadcast %cst_16 : f32 to vector<128x48xf32>
    %19 = arith.maximumf %17, %18 : vector<128x48xf32>
    %c0_17 = arith.constant 0 : index
    %c0_18 = arith.constant 0 : index
    %20 = vector.load %arg8[%c0_17, %c0_18] : memref<1x48xf32, #tpu.memory_space<vmem>>, vector<1x48xf32>
    %21 = vector.broadcast %20 : vector<1x48xf32> to vector<128x48xf32>
    %22 = arith.mulf %19, %21 : vector<128x48xf32>
    %cst_19 = arith.constant dense<0.000000e+00> : vector<128xf32>
    %23 = vector.multi_reduction <add>, %22, %cst_19 [1] : vector<128x48xf32> to vector<128xf32>
    %24 = vector.shape_cast %23 : vector<128xf32> to vector<1x128xf32>
    %c0_20 = arith.constant 0 : index
    %c0_21 = arith.constant 0 : index
    %25 = vector.load %arg9[%c0_20, %c0_21] : memref<1x1xf32, #tpu.memory_space<vmem>>, vector<1x1xf32>
    %26 = vector.broadcast %25 : vector<1x1xf32> to vector<1x128xf32>
    %27 = arith.addf %24, %26 : vector<1x128xf32>
    %c0_22 = arith.constant 0 : index
    %c0_23 = arith.constant 0 : index
    %28 = vector.load %arg10[%c0_22, %c0_23] : memref<1x128xf32, #tpu.memory_space<vmem>>, vector<1x128xf32>
    tpu.vector_store %arg10[%c0_22, %c0_23], %27 {strides = array<i32>} : memref<1x128xf32, #tpu.memory_space<vmem>>, vector<1x128xf32>,
    return
  }
  func.func @transform_0(%arg0: i32) -> (i32, i32) {
    %c0_i32 = arith.constant 0 : i32
    %c0_i32_0 = arith.constant 0 : i32
    return %arg0, %c0_i32 : i32, i32
  }
  func.func @transform_1(%arg0: i32) -> (i32, i32) {
    %c0_i32 = arith.constant 0 : i32
    %c0_i32_0 = arith.constant 0 : i32
    return %arg0, %c0_i32 : i32, i32
  }
  func.func @transform_2(%arg0: i32) -> (i32, i32) {
    %c0_i32 = arith.constant 0 : i32
    %c0_i32_0 = arith.constant 0 : i32
    %c0_i32_1 = arith.constant 0 : i32
    return %c0_i32, %c0_i32_0 : i32, i32
  }
  func.func @transform_3(%arg0: i32) -> (i32, i32) {
    %c0_i32 = arith.constant 0 : i32
    %c0_i32_0 = arith.constant 0 : i32
    %c0_i32_1 = arith.constant 0 : i32
    return %c0_i32, %c0_i32_0 : i32, i32
  }
  func.func @transform_4(%arg0: i32) -> (i32, i32) {
    %c0_i32 = arith.constant 0 : i32
    %c0_i32_0 = arith.constant 0 : i32
    %c0_i32_1 = arith.constant 0 : i32
    return %c0_i32, %c0_i32_0 : i32, i32
  }
  func.func @transform_5(%arg0: i32) -> (i32, i32) {
    %c0_i32 = arith.constant 0 : i32
    %c0_i32_0 = arith.constant 0 : i32
    %c0_i32_1 = arith.constant 0 : i32
    return %c0_i32, %c0_i32_0 : i32, i32
  }
  func.func @transform_6(%arg0: i32) -> (i32, i32) {
    %c0_i32 = arith.constant 0 : i32
    %c0_i32_0 = arith.constant 0 : i32
    %c0_i32_1 = arith.constant 0 : i32
    return %c0_i32, %c0_i32_0 : i32, i32
  }
  func.func @transform_7(%arg0: i32) -> (i32, i32) {
    %c0_i32 = arith.constant 0 : i32
    %c0_i32_0 = arith.constant 0 : i32
    %c0_i32_1 = arith.constant 0 : i32
    return %c0_i32, %c0_i32_0 : i32, i32
  }
  func.func @transform_8(%arg0: i32) -> (i32, i32) {
    %c0_i32 = arith.constant 0 : i32
    %c0_i32_0 = arith.constant 0 : i32
    %c0_i32_1 = arith.constant 0 : i32
    return %c0_i32, %c0_i32_0 : i32, i32
  }
  func.func @transform_9(%arg0: i32) -> (i32, i32) {
    %c0_i32 = arith.constant 0 : i32
    %c0_i32_0 = arith.constant 0 : i32
    return %c0_i32, %arg0 : i32, i32
  }
}

</mosaic_0001>

<llo_original>
// kernel: tpu_custom_call.1
$region0: #{tpu_custom_call.1}
  #allocation0 [shape = 'u32[]', space=smem, size = 0x4, offset = 0x4, fixed_abs, tag = 'smem constant byte address 0x4 - core index']
  #allocation1 [shape = 'u32[72,128]{1,0:T(1,128)}', space=vmem, size = 0x9000, scoped, tag = 'internal scratch']
  #allocation2 [shape = 'f32[1,1]{1,0:T(1,128)S(1)}', space=vmem, size = 0x200, scoped, tag = 'scoped memory for tpu_custom_call.1']
  %s0 = inlined_call_operand.vmem [shape: bf16[128,16], index: 0, kind: input, shape index: {}]
  %s1 = inlined_call_operand.vmem [shape: bf16[128,8], index: 1, kind: input, shape index: {}]
  %s2 = inlined_call_operand.vmem [shape: bf16[16,48], index: 2, kind: input, shape index: {}]
  %s3 = inlined_call_operand.vmem [shape: bf16[8,48], index: 3, kind: input, shape index: {}]
  %s4 = inlined_call_operand.vmem [shape: f32[1,48], index: 4, kind: input, shape index: {}]
  %s5 = inlined_call_operand.vmem [shape: bf16[48,48], index: 5, kind: input, shape index: {}]
  %s6 = inlined_call_operand.vmem [shape: f32[1,48], index: 6, kind: input, shape index: {}]
  %s7 = inlined_call_operand.vmem [shape: f32[1,48], index: 7, kind: input, shape index: {}]
  %s8 = inlined_call_operand.<no memory space> [shape: f32[1,1], index: 8, kind: input, shape index: {}]
  %s9 = inlined_call_operand.hbm [shape: f32[1,128], index: 9, kind: output, shape index: {}]
  %s10 = sld [smem:[#allocation0]]
  $region46: #{tpu_custom_call.1} parent=0
    _
  %s12 = ssub.s32 1, %s10
  %s13 = scalar_select 0, %s12, %s10
  %v14 = vstv %s8
  %15 = vst [vmem:[#allocation2] sm:$0x1] %v14
  $region1: #{tpu_custom_call.1} parent=0
    #allocation3 [shape = 'u8[512]{0}', space=vmem, size = 0x400, scoped, tag = 'output window, operand 0, single buffered']
    #allocation4 [shape = 's32[1]{0}', space=sflag, size = 0x4, scoped, tag = 'scoped memory for tpu_custom_call.1']
    %16 = vsyncpa [#allocation4], 0
    // Predicated region
    $region2: #{tpu_custom_call.1} parent=1 // pred_check
      _
    $region3: #{tpu_custom_call.1} parent=1 // pred_check_branch
      %18 = sbr.rel (0) target = $region5
    $region4: #{tpu_custom_call.1} parent=1 // pred_region
      _
    $region5: #{tpu_custom_call.1} parent=1 // pred_fallthru
      _
    // Predicated region
    $region6: #{tpu_custom_call.1} parent=1 // pred_check
      _
    $region7: #{tpu_custom_call.1} parent=1 // pred_check_branch
      %20 = sbr.rel (0) target = $region9
    $region8: #{tpu_custom_call.1} parent=1 // pred_region
      _
    $region9: #{tpu_custom_call.1} parent=1 // pred_fallthru
      _
    // Predicated region
    $region10: #{tpu_custom_call.1} parent=1 // pred_check
      _
    $region11: #{tpu_custom_call.1} parent=1 // pred_check_branch
      %22 = sbr.rel (0) target = $region13
    $region12: #{tpu_custom_call.1} parent=1 // pred_region
      _
    $region13: #{tpu_custom_call.1} parent=1 // pred_fallthru
      _
    // Predicated region
    $region14: #{tpu_custom_call.1} parent=1 // pred_check
      _
    $region15: #{tpu_custom_call.1} parent=1 // pred_check_branch
      %24 = sbr.rel (0) target = $region17
    $region16: #{tpu_custom_call.1} parent=1 // pred_region
      _
    $region17: #{tpu_custom_call.1} parent=1 // pred_fallthru
      _
    // Predicated region
    $region18: #{tpu_custom_call.1} parent=1 // pred_check
      _
    $region19: #{tpu_custom_call.1} parent=1 // pred_check_branch
      %26 = sbr.rel (0) target = $region21
    $region20: #{tpu_custom_call.1} parent=1 // pred_region
      _
    $region21: #{tpu_custom_call.1} parent=1 // pred_fallthru
      _
    // Predicated region
    $region22: #{tpu_custom_call.1} parent=1 // pred_check
      _
    $region23: #{tpu_custom_call.1} parent=1 // pred_check_branch
      %28 = sbr.rel (0) target = $region25
    $region24: #{tpu_custom_call.1} parent=1 // pred_region
      _
    $region25: #{tpu_custom_call.1} parent=1 // pred_fallthru
      _
    // Predicated region
    $region26: #{tpu_custom_call.1} parent=1 // pred_check
      _
    $region27: #{tpu_custom_call.1} parent=1 // pred_check_branch
      %30 = sbr.rel (0) target = $region29
    $region28: #{tpu_custom_call.1} parent=1 // pred_region
      _
    $region29: #{tpu_custom_call.1} parent=1 // pred_fallthru
      _
    // Predicated region
    $region30: #{tpu_custom_call.1} parent=1 // pred_check
      _
    $region31: #{tpu_custom_call.1} parent=1 // pred_check_branch
      %32 = sbr.rel (0) target = $region33
    $region32: #{tpu_custom_call.1} parent=1 // pred_region
      _
    $region33: #{tpu_custom_call.1} parent=1 // pred_fallthru
      _
    // Predicated region
    $region34: #{tpu_custom_call.1} parent=1 // pred_check
      _
    $region35: #{tpu_custom_call.1} parent=1 // pred_check_branch
      %34 = sbr.rel (0) target = $region37
    $region36: #{tpu_custom_call.1} parent=1 // pred_region
      _
    $region37: #{tpu_custom_call.1} parent=1 // pred_fallthru
      _
    %v36 = vld [vmem:[%s0] sm:$0xf]
    %v37 = vld [vmem:[%s0 + $0x4] sm:$0xf]
    %v38 = vld [vmem:[%s0 + $0x8] sm:$0xf]
    %v39 = vld [vmem:[%s0 + $0xc] sm:$0xf]
    %v40 = vld [vmem:[%s0 + $0x10] sm:$0xf]
    %v41 = vld [vmem:[%s0 + $0x14] sm:$0xf]
    %v42 = vld [vmem:[%s0 + $0x18] sm:$0xf]
    %v43 = vld [vmem:[%s0 + $0x1c] sm:$0xf]
    %v44 = vld [vmem:[%s0 + $0x20] sm:$0xf]
    %v45 = vld [vmem:[%s0 + $0x24] sm:$0xf]
    %v46 = vld [vmem:[%s0 + $0x28] sm:$0xf]
    %v47 = vld [vmem:[%s0 + $0x2c] sm:$0xf]
    %v48 = vld [vmem:[%s0 + $0x30] sm:$0xf]
    %v49 = vld [vmem:[%s0 + $0x34] sm:$0xf]
    %v50 = vld [vmem:[%s0 + $0x38] sm:$0xf]
    %v51 = vld [vmem:[%s0 + $0x3c] sm:$0xf]
    %v52 = vld [vmem:[%s2] sm:$0xf]
    %v53 = vld [vmem:[%s2 + $0x4] sm:$0xf]
    %v54 = vld [vmem:[%s1] sm:$0xf]
    %v55 = vld [vmem:[%s1 + $0x4] sm:$0xf]
    %v56 = vld [vmem:[%s1 + $0x8] sm:$0xf]
    %v57 = vld [vmem:[%s1 + $0xc] sm:$0xf]
    %v58 = vld [vmem:[%s1 + $0x10] sm:$0xf]
    %v59 = vld [vmem:[%s1 + $0x14] sm:$0xf]
    %v60 = vld [vmem:[%s1 + $0x18] sm:$0xf]
    %v61 = vld [vmem:[%s1 + $0x1c] sm:$0xf]
    %v62 = vld [vmem:[%s1 + $0x20] sm:$0xf]
    %v63 = vld [vmem:[%s1 + $0x24] sm:$0xf]
    %v64 = vld [vmem:[%s1 + $0x28] sm:$0xf]
    %v65 = vld [vmem:[%s1 + $0x2c] sm:$0xf]
    %v66 = vld [vmem:[%s1 + $0x30] sm:$0xf]
    %v67 = vld [vmem:[%s1 + $0x34] sm:$0xf]
    %v68 = vld [vmem:[%s1 + $0x38] sm:$0xf]
    %v69 = vld [vmem:[%s1 + $0x3c] sm:$0xf]
    %v70 = vld [vmem:[%s3] sm:$0xf]
    %v87 = vunpack.c.l.b16 %v54
    %v88 = vunpack.c.l.b16 %v55
    %v89 = vunpack.c.l.b16 %v56
    %v90 = vunpack.c.l.b16 %v57
    %v91 = vunpack.c.l.b16 %v58
    %v92 = vunpack.c.l.b16 %v59
    %v93 = vunpack.c.l.b16 %v60
    %v94 = vunpack.c.l.b16 %v61
    %v95 = vunpack.c.l.b16 %v62
    %v96 = vunpack.c.l.b16 %v63
    %v97 = vunpack.c.l.b16 %v64
    %v98 = vunpack.c.l.b16 %v65
    %v99 = vunpack.c.l.b16 %v66
    %v100 = vunpack.c.l.b16 %v67
    %v101 = vunpack.c.l.b16 %v68
    %v102 = vunpack.c.l.b16 %v69
    %v103 = vpack.c.b16 %v88, %v87
    %v104 = vpack.c.b16 %v90, %v89
    %v105 = vpack.c.b16 %v92, %v91
    %v106 = vpack.c.b16 %v94, %v93
    %v107 = vpack.c.b16 %v96, %v95
    %v108 = vpack.c.b16 %v98, %v97
    %v109 = vpack.c.b16 %v100, %v99
    %v110 = vpack.c.b16 %v102, %v101
    %vm111 = vcmask 64512
    %v113 = vsel %vm111, %v103, 0
    %v116 = vsel %vm111, %v104, 0
    %v119 = vsel %vm111, %v105, 0
    %v122 = vsel %vm111, %v106, 0
    %v125 = vsel %vm111, %v107, 0
    %v128 = vsel %vm111, %v108, 0
    %v131 = vsel %vm111, %v109, 0
    %v134 = vsel %vm111, %v110, 0
    %vm136 = vcmask 1043456
    %v138 = vsel %vm136, %v70, 0
    %140 = vmatpush.bf16.msra.mxu0 0
    %141 = vmatpush.bf16.msra.mxu0 0
    %142 = vmatpush.bf16.msra.mxu0 0
    %143 = vmatpush.bf16.msra.mxu0 0
    %144 = vmatpush.bf16.msra.mxu0 0
    %145 = vmatpush.bf16.msra.mxu0 0
    %146 = vmatpush.bf16.msra.mxu0 0
    %147 = vmatpush.bf16.msra.mxu0 %v138
    %148 = vmatmul.bf16.gmra.mxu0 %v113
    %v149 = vpop.f32.mrf.mxu0
    %v150 = vadd.f32 0.0, %v149
    %v151 = vpop.f32.mrf.mxu0
    %v152 = vadd.f32 0.0, %v151
    %153 = vmatmul.bf16.gmra.mxu0 %v116
    %v154 = vpop.f32.mrf.mxu0
    %v155 = vadd.f32 0.0, %v154
    %v156 = vpop.f32.mrf.mxu0
    %v157 = vadd.f32 0.0, %v156
    %158 = vmatmul.bf16.gmra.mxu0 %v119
    %v159 = vpop.f32.mrf.mxu0
    %v160 = vadd.f32 0.0, %v159
    %v161 = vpop.f32.mrf.mxu0
    %v162 = vadd.f32 0.0, %v161
    %163 = vmatmul.bf16.gmra.mxu0 %v122
    %v164 = vpop.f32.mrf.mxu0
    %v165 = vadd.f32 0.0, %v164
    %v166 = vpop.f32.mrf.mxu0
    %v167 = vadd.f32 0.0, %v166
    %168 = vmatmul.bf16.gmra.mxu0 %v125
    %v169 = vpop.f32.mrf.mxu0
    %v170 = vadd.f32 0.0, %v169
    %v171 = vpop.f32.mrf.mxu0
    %v172 = vadd.f32 0.0, %v171
    %173 = vmatmul.bf16.gmra.mxu0 %v128
    %v174 = vpop.f32.mrf.mxu0
    %v175 = vadd.f32 0.0, %v174
    %v176 = vpop.f32.mrf.mxu0
    %v177 = vadd.f32 0.0, %v176
    %178 = vmatmul.bf16.gmra.mxu0 %v131
    %v179 = vpop.f32.mrf.mxu0
    %v180 = vadd.f32 0.0, %v179
    %v181 = vpop.f32.mrf.mxu0
    %v182 = vadd.f32 0.0, %v181
    %183 = vmatmul.bf16.gmra.mxu0 %v134
    %v184 = vpop.f32.mrf.mxu0
    %v185 = vadd.f32 0.0, %v184
    %v186 = vpop.f32.mrf.mxu0
    %v187 = vadd.f32 0.0, %v186
    %188 = vdwg.mxu0
    %v205 = vunpack.c.l.b16 %v36
    %v206 = vunpack.c.l.b16 %v37
    %v207 = vunpack.c.l.b16 %v38
    %v208 = vunpack.c.l.b16 %v39
    %v209 = vunpack.c.l.b16 %v40
    %v210 = vunpack.c.l.b16 %v41
    %v211 = vunpack.c.l.b16 %v42
    %v212 = vunpack.c.l.b16 %v43
    %v213 = vunpack.c.l.b16 %v44
    %v214 = vunpack.c.l.b16 %v45
    %v215 = vunpack.c.l.b16 %v46
    %v216 = vunpack.c.l.b16 %v47
    %v217 = vunpack.c.l.b16 %v48
    %v218 = vunpack.c.l.b16 %v49
    %v219 = vunpack.c.l.b16 %v50
    %v220 = vunpack.c.l.b16 %v51
    %v221 = vpack.c.b16 %v206, %v205
    %v222 = vpack.c.b16 %v208, %v207
    %v223 = vpack.c.b16 %v210, %v209
    %v224 = vpack.c.b16 %v212, %v211
    %v225 = vpack.c.b16 %v214, %v213
    %v226 = vpack.c.b16 %v216, %v215
    %v227 = vpack.c.b16 %v218, %v217
    %v228 = vpack.c.b16 %v220, %v219
    %v231 = vunpack.c.l.b16 %v52
    %v232 = vunpack.c.l.b16 %v53
    %v233 = vpack.c.b16 %v232, %v231
    %vm235 = vcmask 130048
    %v237 = vsel %vm235, %v221, 0
    %v240 = vsel %vm235, %v222, 0
    %v243 = vsel %vm235, %v223, 0
    %v246 = vsel %vm235, %v224, 0
    %v249 = vsel %vm235, %v225, 0
    %v252 = vsel %vm235, %v226, 0
    %v255 = vsel %vm235, %v227, 0
    %v258 = vsel %vm235, %v228, 0
    %260 = vmatpush.bf16.msra.mxu0 0
    %261 = vmatpush.bf16.msra.mxu0 0
    %262 = vmatpush.bf16.msra.mxu0 0
    %263 = vmatpush.bf16.msra.mxu0 0
    %264 = vmatpush.bf16.msra.mxu0 0
    %265 = vmatpush.bf16.msra.mxu0 0
    %266 = vmatpush.bf16.msra.mxu0 0
    %267 = vmatpush.bf16.msra.mxu0 %v233
    %268 = vmatmul.bf16.gmra.mxu0 %v237
    %v269 = vpop.f32.mrf.mxu0
    %v270 = vadd.f32 %v150, %v269
    %v271 = vpop.f32.mrf.mxu0
    %v272 = vadd.f32 %v152, %v271
    %273 = vmatmul.bf16.gmra.mxu0 %v240
    %v274 = vpop.f32.mrf.mxu0
    %v275 = vadd.f32 %v155, %v274
    %v276 = vpop.f32.mrf.mxu0
    %v277 = vadd.f32 %v157, %v276
    %278 = vmatmul.bf16.gmra.mxu0 %v243
    %v279 = vpop.f32.mrf.mxu0
    %v280 = vadd.f32 %v160, %v279
    %v281 = vpop.f32.mrf.mxu0
    %v282 = vadd.f32 %v162, %v281
    %283 = vmatmul.bf16.gmra.mxu0 %v246
    %v284 = vpop.f32.mrf.mxu0
    %v285 = vadd.f32 %v165, %v284
    %v286 = vpop.f32.mrf.mxu0
    %v287 = vadd.f32 %v167, %v286
    %288 = vmatmul.bf16.gmra.mxu0 %v249
    %v289 = vpop.f32.mrf.mxu0
    %v290 = vadd.f32 %v170, %v289
    %v291 = vpop.f32.mrf.mxu0
    %v292 = vadd.f32 %v172, %v291
    %293 = vmatmul.bf16.gmra.mxu0 %v252
    %v294 = vpop.f32.mrf.mxu0
    %v295 = vadd.f32 %v175, %v294
    %v296 = vpop.f32.mrf.mxu0
    %v297 = vadd.f32 %v177, %v296
    %298 = vmatmul.bf16.gmra.mxu0 %v255
    %v299 = vpop.f32.mrf.mxu0
    %v300 = vadd.f32 %v180, %v299
    %v301 = vpop.f32.mrf.mxu0
    %v302 = vadd.f32 %v182, %v301
    %303 = vmatmul.bf16.gmra.mxu0 %v258
    %v304 = vpop.f32.mrf.mxu0
    %v305 = vadd.f32 %v185, %v304
    %v306 = vpop.f32.mrf.mxu0
    %v307 = vadd.f32 %v187, %v306
    %308 = vdwg.mxu0
    %v309 = vld [vmem:[%s4] sm:$0x1]
    %v311 = vperm.slane %v309, 0
    %v313 = vadd.f32 %v270, %v311
    %v314 = vadd.f32 %v272, %v311
    %v315 = vadd.f32 %v275, %v311
    %v316 = vadd.f32 %v277, %v311
    %v317 = vadd.f32 %v280, %v311
    %v318 = vadd.f32 %v282, %v311
    %v319 = vadd.f32 %v285, %v311
    %v320 = vadd.f32 %v287, %v311
    %v321 = vadd.f32 %v290, %v311
    %v322 = vadd.f32 %v292, %v311
    %v323 = vadd.f32 %v295, %v311
    %v324 = vadd.f32 %v297, %v311
    %v325 = vadd.f32 %v300, %v311
    %v326 = vadd.f32 %v302, %v311
    %v327 = vadd.f32 %v305, %v311
    %v328 = vadd.f32 %v307, %v311
    %v329 = vmax.f32 %v313, 0.0
    %v330 = vmax.f32 %v314, 0.0
    %v331 = vmax.f32 %v315, 0.0
    %v332 = vmax.f32 %v316, 0.0
    %v333 = vmax.f32 %v317, 0.0
    %v334 = vmax.f32 %v318, 0.0
    %v335 = vmax.f32 %v319, 0.0
    %v336 = vmax.f32 %v320, 0.0
    %v337 = vmax.f32 %v321, 0.0
    %v338 = vmax.f32 %v322, 0.0
    %v339 = vmax.f32 %v323, 0.0
    %v340 = vmax.f32 %v324, 0.0
    %v341 = vmax.f32 %v325, 0.0
    %v342 = vmax.f32 %v326, 0.0
    %v343 = vmax.f32 %v327, 0.0
    %v344 = vmax.f32 %v328, 0.0
    %v345 = vpack.c.bf16 %v330, %v329
    %v346 = vpack.c.bf16 %v332, %v331
    %v347 = vpack.c.bf16 %v334, %v333
    %v348 = vpack.c.bf16 %v336, %v335
    %v349 = vpack.c.bf16 %v338, %v337
    %v350 = vpack.c.bf16 %v340, %v339
    %v351 = vpack.c.bf16 %v342, %v341
    %v352 = vpack.c.bf16 %v344, %v343
    %v353 = vld [vmem:[%s5] sm:$0xf]
    %v354 = vld [vmem:[%s5 + $0x4] sm:$0xf]
    %v355 = vld [vmem:[%s5 + $0x8] sm:$0xf]
    %v356 = vld [vmem:[%s5 + $0xc] sm:$0xf]
    %v357 = vld [vmem:[%s5 + $0x10] sm:$0xf]
    %v358 = vld [vmem:[%s5 + $0x14] sm:$0xf]
    %v359 = vld [vmem:[%s6] sm:$0x1]
    %v361 = vperm.slane %v359, 0
    %v369 = vunpack.c.l.b16 %v353
    %v370 = vunpack.c.l.b16 %v354
    %v371 = vunpack.c.l.b16 %v355
    %v372 = vunpack.c.l.b16 %v356
    %v373 = vunpack.c.l.b16 %v357
    %v374 = vunpack.c.l.b16 %v358
    %v375 = vpack.c.b16 %v370, %v369
    %v376 = vpack.c.b16 %v372, %v371
    %v377 = vpack.c.b16 %v374, %v373
    %vm381 = vcmask 392192
    %v383 = vsel %vm381, %v345, 0
    %v386 = vsel %vm381, %v346, 0
    %v389 = vsel %vm381, %v347, 0
    %v392 = vsel %vm381, %v348, 0
    %v395 = vsel %vm381, %v349, 0
    %v398 = vsel %vm381, %v350, 0
    %v401 = vsel %vm381, %v351, 0
    %v404 = vsel %vm381, %v352, 0
    %406 = vmatpush.bf16.msra.mxu0 0
    %407 = vmatpush.bf16.msra.mxu0 0
    %408 = vmatpush.bf16.msra.mxu0 0
    %409 = vmatpush.bf16.msra.mxu0 0
    %410 = vmatpush.bf16.msra.mxu0 0
    %411 = vmatpush.bf16.msra.mxu0 %v377
    %412 = vmatpush.bf16.msra.mxu0 %v376
    %413 = vmatpush.bf16.msra.mxu0 %v375
    %414 = vmatmul.bf16.gmra.mxu0 %v383
    %v415 = vpop.f32.mrf.mxu0
    %v416 = vadd.f32 %v361, %v415
    %v417 = vpop.f32.mrf.mxu0
    %v418 = vadd.f32 %v361, %v417
    %419 = vmatmul.bf16.gmra.mxu0 %v386
    %v420 = vpop.f32.mrf.mxu0
    %v421 = vadd.f32 %v361, %v420
    %v422 = vpop.f32.mrf.mxu0
    %v423 = vadd.f32 %v361, %v422
    %424 = vmatmul.bf16.gmra.mxu0 %v389
    %v425 = vpop.f32.mrf.mxu0
    %v426 = vadd.f32 %v361, %v425
    %v427 = vpop.f32.mrf.mxu0
    %v428 = vadd.f32 %v361, %v427
    %429 = vmatmul.bf16.gmra.mxu0 %v392
    %v430 = vpop.f32.mrf.mxu0
    %v431 = vadd.f32 %v361, %v430
    %v432 = vpop.f32.mrf.mxu0
    %v433 = vadd.f32 %v361, %v432
    %434 = vmatmul.bf16.gmra.mxu0 %v395
    %v435 = vpop.f32.mrf.mxu0
    %v436 = vadd.f32 %v361, %v435
    %v437 = vpop.f32.mrf.mxu0
    %v438 = vadd.f32 %v361, %v437
    %439 = vmatmul.bf16.gmra.mxu0 %v398
    %v440 = vpop.f32.mrf.mxu0
    %v441 = vadd.f32 %v361, %v440
    %v442 = vpop.f32.mrf.mxu0
    %v443 = vadd.f32 %v361, %v442
    %444 = vmatmul.bf16.gmra.mxu0 %v401
    %v445 = vpop.f32.mrf.mxu0
    %v446 = vadd.f32 %v361, %v445
    %v447 = vpop.f32.mrf.mxu0
    %v448 = vadd.f32 %v361, %v447
    %449 = vmatmul.bf16.gmra.mxu0 %v404
    %v450 = vpop.f32.mrf.mxu0
    %v451 = vadd.f32 %v361, %v450
    %v452 = vpop.f32.mrf.mxu0
    %v453 = vadd.f32 %v361, %v452
    %454 = vdwg.mxu0
    %v455 = vmax.f32 %v416, 0.0
    %v456 = vmax.f32 %v418, 0.0
    %v457 = vmax.f32 %v421, 0.0
    %v458 = vmax.f32 %v423, 0.0
    %v459 = vmax.f32 %v426, 0.0
    %v460 = vmax.f32 %v428, 0.0
    %v461 = vmax.f32 %v431, 0.0
    %v462 = vmax.f32 %v433, 0.0
    %v463 = vmax.f32 %v436, 0.0
    %v464 = vmax.f32 %v438, 0.0
    %v465 = vmax.f32 %v441, 0.0
    %v466 = vmax.f32 %v443, 0.0
    %v467 = vmax.f32 %v446, 0.0
    %v468 = vmax.f32 %v448, 0.0
    %v469 = vmax.f32 %v451, 0.0
    %v470 = vmax.f32 %v453, 0.0
    %v471 = vld [vmem:[%s7] sm:$0x1]
    %v473 = vperm.slane %v471, 0
    %v475 = vmul.f32 %v455, %v473
    %v476 = vmul.f32 %v456, %v473
    %v477 = vmul.f32 %v457, %v473
    %v478 = vmul.f32 %v458, %v473
    %v479 = vmul.f32 %v459, %v473
    %v480 = vmul.f32 %v460, %v473
    %v481 = vmul.f32 %v461, %v473
    %v482 = vmul.f32 %v462, %v473
    %v483 = vmul.f32 %v463, %v473
    %v484 = vmul.f32 %v464, %v473
    %v485 = vmul.f32 %v465, %v473
    %v486 = vmul.f32 %v466, %v473
    %v487 = vmul.f32 %v467, %v473
    %v488 = vmul.f32 %v468, %v473
    %v489 = vmul.f32 %v469, %v473
    %v490 = vmul.f32 %v470, %v473
    %v491 = vsel %vm381, %v475, 0.0
    %492 = vadd.xlane.f32.xlu0 %v491
    %v493 = vpop.xlane.xlu0 %492
    %v494 = vsel %vm381, %v476, 0.0
    %495 = vadd.xlane.f32.xlu0 %v494
    %v496 = vpop.xlane.xlu0 %495
    %v497 = vsel %vm381, %v477, 0.0
    %498 = vadd.xlane.f32.xlu0 %v497
    %v499 = vpop.xlane.xlu0 %498
    %v500 = vsel %vm381, %v478, 0.0
    %501 = vadd.xlane.f32.xlu0 %v500
    %v502 = vpop.xlane.xlu0 %501
    %v503 = vsel %vm381, %v479, 0.0
    %504 = vadd.xlane.f32.xlu0 %v503
    %v505 = vpop.xlane.xlu0 %504
    %v506 = vsel %vm381, %v480, 0.0
    %507 = vadd.xlane.f32.xlu0 %v506
    %v508 = vpop.xlane.xlu0 %507
    %v509 = vsel %vm381, %v481, 0.0
    %510 = vadd.xlane.f32.xlu0 %v509
    %v511 = vpop.xlane.xlu0 %510
    %v512 = vsel %vm381, %v482, 0.0
    %513 = vadd.xlane.f32.xlu0 %v512
    %v514 = vpop.xlane.xlu0 %513
    %v515 = vsel %vm381, %v483, 0.0
    %516 = vadd.xlane.f32.xlu0 %v515
    %v517 = vpop.xlane.xlu0 %516
    %v518 = vsel %vm381, %v484, 0.0
    %519 = vadd.xlane.f32.xlu0 %v518
    %v520 = vpop.xlane.xlu0 %519
    %v521 = vsel %vm381, %v485, 0.0
    %522 = vadd.xlane.f32.xlu0 %v521
    %v523 = vpop.xlane.xlu0 %522
    %v524 = vsel %vm381, %v486, 0.0
    %525 = vadd.xlane.f32.xlu0 %v524
    %v526 = vpop.xlane.xlu0 %525
    %v527 = vsel %vm381, %v487, 0.0
    %528 = vadd.xlane.f32.xlu0 %v527
    %v529 = vpop.xlane.xlu0 %528
    %v530 = vsel %vm381, %v488, 0.0
    %531 = vadd.xlane.f32.xlu0 %v530
    %v532 = vpop.xlane.xlu0 %531
    %v533 = vsel %vm381, %v489, 0.0
    %534 = vadd.xlane.f32.xlu0 %v533
    %v535 = vpop.xlane.xlu0 %534
    %v536 = vsel %vm381, %v490, 0.0
    %537 = vadd.xlane.f32.xlu0 %v536
    %v538 = vpop.xlane.xlu0 %537
    %v539 = vld [vmem:[#allocation2] sm:$0x1]
    %541 = vset.pattern.permute.xlu0 0
    %542 = vperm.xlu0 %541, %v539
    %v543 = vpop.permute.xlu0 %542
    %v545 = vperm.slane %v543, 0
    %v546 = vadd.f32 %v493, %v545
    %v547 = vadd.f32 %v496, %v545
    %v548 = vadd.f32 %v499, %v545
    %v549 = vadd.f32 %v502, %v545
    %v550 = vadd.f32 %v505, %v545
    %v551 = vadd.f32 %v508, %v545
    %v552 = vadd.f32 %v511, %v545
    %v553 = vadd.f32 %v514, %v545
    %v554 = vadd.f32 %v517, %v545
    %v555 = vadd.f32 %v520, %v545
    %v556 = vadd.f32 %v523, %v545
    %v557 = vadd.f32 %v526, %v545
    %v558 = vadd.f32 %v529, %v545
    %v559 = vadd.f32 %v532, %v545
    %v560 = vadd.f32 %v535, %v545
    %v561 = vadd.f32 %v538, %v545
    %v578 = vlaneseq
    %v579 = vand.u32 %v578, 127
    %v580 = vperm.slane %v546, %v579
    %v581 = vadd.s32 %v579, 4294967288
    %v582 = vperm.slane %v547, %v581
    %vm583 = vcmask 130112
    %v584 = vsel %vm583, %v582, %v580
    %v585 = vadd.s32 %v579, 4294967280
    %v586 = vperm.slane %v548, %v585
    %vm587 = vcmask 195712
    %v588 = vsel %vm587, %v586, %v584
    %v589 = vadd.s32 %v579, 4294967272
    %v590 = vperm.slane %v549, %v589
    %vm591 = vcmask 261312
    %v592 = vsel %vm591, %v590, %v588
    %v593 = vadd.s32 %v579, 4294967264
    %v594 = vperm.slane %v550, %v593
    %vm595 = vcmask 326912
    %v596 = vsel %vm595, %v594, %v592
    %v597 = vadd.s32 %v579, 4294967256
    %v598 = vperm.slane %v551, %v597
    %vm599 = vcmask 392512
    %v600 = vsel %vm599, %v598, %v596
    %v601 = vadd.s32 %v579, 4294967248
    %v602 = vperm.slane %v552, %v601
    %vm603 = vcmask 458112
    %v604 = vsel %vm603, %v602, %v600
    %v605 = vadd.s32 %v579, 4294967240
    %v606 = vperm.slane %v553, %v605
    %vm607 = vcmask 523712
    %v608 = vsel %vm607, %v606, %v604
    %v609 = vadd.s32 %v579, 4294967232
    %v610 = vperm.slane %v554, %v609
    %vm611 = vcmask 589312
    %v612 = vsel %vm611, %v610, %v608
    %v613 = vadd.s32 %v579, 4294967224
    %v614 = vperm.slane %v555, %v613
    %vm615 = vcmask 654912
    %v616 = vsel %vm615, %v614, %v612
    %v617 = vadd.s32 %v579, 4294967216
    %v618 = vperm.slane %v556, %v617
    %vm619 = vcmask 720512
    %v620 = vsel %vm619, %v618, %v616
    %v621 = vadd.s32 %v579, 4294967208
    %v622 = vperm.slane %v557, %v621
    %vm623 = vcmask 786112
    %v624 = vsel %vm623, %v622, %v620
    %v625 = vadd.s32 %v579, 4294967200
    %v626 = vperm.slane %v558, %v625
    %vm627 = vcmask 851712
    %v628 = vsel %vm627, %v626, %v624
    %v629 = vadd.s32 %v579, 4294967192
    %v630 = vperm.slane %v559, %v629
    %vm631 = vcmask 917312
    %v632 = vsel %vm631, %v630, %v628
    %v633 = vadd.s32 %v579, 4294967184
    %v634 = vperm.slane %v560, %v633
    %vm635 = vcmask 982912
    %v636 = vsel %vm635, %v634, %v632
    %v637 = vadd.s32 %v579, 4294967176
    %v638 = vperm.slane %v561, %v637
    %vm639 = vcmask 1048512
    %v640 = vsel %vm639, %v638, %v636
    %642 = vst [vmem:[#allocation3] sm:$0x1] %v640
    // Predicated region
    $region38: #{tpu_custom_call.1} parent=1 // pred_check
      _
    $region39: #{tpu_custom_call.1} parent=1 // pred_check_branch
      %644 = sbr.rel (0) target = $region41
    $region40: #{tpu_custom_call.1} parent=1 // pred_region
      %646 = vsyncadd [#allocation4], 0
      %s648 = sshll.u32 [#allocation3], 4
      %s649 = int_to_ptr.vmem [resolvable:$true] %s648
      %s650 = sshll.u32 %s9, 4
      %s651 = int_to_ptr.hbm [resolvable:$true] %s650
      %653 = dma.vmem_to_hbm [thread:$0]  %s649, 16, %s651, [#allocation4]
    $region41: #{tpu_custom_call.1} parent=1 // pred_fallthru
      _
    // Predicated region
    $region42: #{tpu_custom_call.1} parent=1 // pred_check
      _
    $region43: #{tpu_custom_call.1} parent=1 // pred_check_branch
      %655 = sbr.rel (0) target = $region45
    $region44: #{tpu_custom_call.1} parent=1 // pred_region
      %657 = dma.done [#allocation4], 16
    $region45: #{tpu_custom_call.1} parent=1 // pred_fallthru
      _
    %658 = vsyncpa [#allocation4], 1

</llo_original>
